<compile_context>
chip_gen: v6e
topology: v6e:2x2x1
jax: 0.10.0
libtpu: 0.0.40
codegen_flags: <defaults>
</compile_context>

<pallas_src>
import jax
import jax.numpy as jnp
from jax.experimental import pallas as pl
from jax.experimental.pallas import tpu as pltpu


def _deconv_relu_kernel(w_ref, x_ref, b_ref, o_ref):
    # w_ref: (R, C_in)   x_ref: (C_in, TN)   b_ref: (R, 1)   o_ref: (R, TN)
    acc = jnp.dot(w_ref[...], x_ref[...], preferred_element_type=jnp.float32)
    acc = acc + b_ref[...]                       # lane-broadcast of per-row bias
    o_ref[...] = jnp.maximum(acc, 0.0).astype(o_ref.dtype)


def upsampling_deconv_block(x, weight, bias, stride=2, tn=1024):
    """x: (N, C_in, D, H, W); weight: (C_in, C_out, s, s, s); bias: (C_out,).

    Returns relu(conv_transpose3d(x, weight, bias, stride=s)) in NCDHW layout,
    shape (N, C_out, D*s, H*s, W*s).
    """
    N, C_in, D, H, W = x.shape
    s = stride
    C_out = weight.shape[1]
    assert weight.shape == (C_in, C_out, s, s, s)

    R = s * s * s * C_out            # output rows per voxel, ordered (kd, kh, kw, co)
    DHW = D * H * W
    LANE = 128
    itemsize = jnp.dtype(x.dtype).itemsize

    # ---- trace-time reshapes of the tiny parameters --------------------------------
    # W_t[(kd,kh,kw,co), ci] ; b_t[(kd,kh,kw,co), 1]
    w_t = jnp.transpose(weight, (2, 3, 4, 1, 0)).reshape(R, C_in).astype(x.dtype)
    b_t = jnp.tile(bias, s * s * s).reshape(R, 1).astype(jnp.float32)

    # Input stays in NCDHW order: just a (free) reshape, no wrapper transpose.
    x3 = x.reshape(N, C_in, DHW)

    # Voxel tiling on the lane axis: multiple of 128 -> unmasked lane-dense stores.
    tn = max(LANE, min(tn, ((DHW + LANE - 1) // LANE) * LANE))
    tn = ((tn + LANE - 1) // LANE) * LANE
    n_j = pl.cdiv(DHW, tn)
    dhw_pad = n_j * tn
    if dhw_pad != DHW:
        x3 = jnp.pad(x3, ((0, 0), (0, 0), (0, dhw_pad - DHW)))

    grid = (N, n_j)

    # VMEM budget: double-buffered x / out tiles + resident weight & bias + headroom.
    need = (2 * C_in * tn + 2 * R * tn + R * C_in + R) * itemsize
    vmem_limit = int(min(max(need + (4 << 20), 16 << 20), 64 << 20))

    cost = pl.CostEstimate(
        flops=2 * N * dhw_pad * C_in * R,
        transcendentals=0,
        bytes_accessed=(N * C_in * dhw_pad + R * C_in + R + N * R * dhw_pad) * itemsize,
    )

    # TODO(synk): for very large C_in (>~1024) add a K grid axis with an f32 VMEM
    # accumulator instead of keeping the full contraction in one block.
    y_t = pl.pallas_call(
        _deconv_relu_kernel,
        out_shape=jax.ShapeDtypeStruct((N, R, dhw_pad), x.dtype),
        grid_spec=pltpu.PrefetchScalarGridSpec(
            num_scalar_prefetch=0,
            grid=grid,
            in_specs=[
                pl.BlockSpec((R, C_in), lambda n, j: (0, 0)),                     # weight (resident)
                pl.BlockSpec((pl.Squeezed(), C_in, tn), lambda n, j: (n, 0, j)),  # x tile
                pl.BlockSpec((R, 1), lambda n, j: (0, 0)),                        # bias (resident)
            ],
            out_specs=pl.BlockSpec((pl.Squeezed(), R, tn), lambda n, j: (n, 0, j)),
        ),
        compiler_params=pltpu.CompilerParams(
            dimension_semantics=("parallel", "parallel"),
            vmem_limit_bytes=vmem_limit,
        ),
        cost_estimate=cost,
    )(w_t, x3, b_t)

    # Drop voxel padding, then scatter the non-overlapping s^3 blocks back to NCDHW.
    # (n, kd, kh, kw, co, d, h, w) -> (n, co, d, kd, h, kh, w, kw) -> merge.
    y_t = y_t[:, :, :DHW].reshape(N, s, s, s, C_out, D, H, W)
    y = jnp.transpose(y_t, (0, 4, 5, 1, 6, 2, 7, 3)).reshape(
        N, C_out, D * s, H * s, W * s)
    return y


def reference(x, weight, bias, stride=2):
    """Plain-JAX reference for the non-overlapping ConvTranspose3d + ReLU."""
    N, C_in, D, H, W = x.shape
    s = stride
    C_out = weight.shape[1]
    # out[n,co,d*s+kd,h*s+kh,w*s+kw] = sum_ci x[n,ci,d,h,w] * W[ci,co,kd,kh,kw] + b[co]
    y = jnp.einsum("ncdhw,cokpq->nodkhpwq", x, weight)
    y = y.reshape(N, C_out, D * s, H * s, W * s)
    y = y + bias[None, :, None, None, None]
    return jnp.maximum(y, 0.0)


if __name__ == "__main__":
    key = jax.random.PRNGKey(0)
    k1, k2, k3 = jax.random.split(key, 3)

    # Small shapes consistent with the module: batch=2, n_filters_in=4,
    # n_filters_out=8, spatial 8^3 (upsampled to 16^3), stride=2.
    N, C_in, C_out, D, H, W, s = 2, 4, 8, 8, 8, 8, 2

    x = jax.random.normal(k1, (N, C_in, D, H, W), dtype=jnp.float32)
    weight = 0.1 * jax.random.normal(k2, (C_in, C_out, s, s, s), dtype=jnp.float32)
    bias = 0.1 * jax.random.normal(k3, (C_out,), dtype=jnp.float32)

    out = upsampling_deconv_block(x, weight, bias, stride=s)
    out = jax.block_until_ready(out)

    ref = reference(x, weight, bias, stride=s)
    assert out.shape == (N, C_out, D * s, H * s, W * s), out.shape
    assert jnp.allclose(out, ref, atol=1e-5, rtol=1e-5), "mismatch vs reference"

    print("KERNEL_OK")
</pallas_src>

<mosaic_0001>
module attributes {stable_mosaic.version = 11 : i64} {
  func.func @_deconv_relu_kernel(%arg0: i32, %arg1: i32, %arg2: memref<64x4xf32, #tpu.memory_space<vmem>>, %arg3: memref<1x4x512xf32, #tpu.memory_space<vmem>>, %arg4: memref<64x1xf32, #tpu.memory_space<vmem>>, %arg5: memref<1x64x512xf32, #tpu.memory_space<vmem>>) attributes {dimension_semantics = [#tpu.dimension_semantics<parallel>, #tpu.dimension_semantics<parallel>], iteration_bounds = array<i64: 2, 1>, scalar_prefetch = 0 : i64, scratch_operands = 0 : i64, tpu.core_type = #tpu.core_type<tc>, window_params = [{pipeline_mode = #tpu.pipeline_mode<synchronous>, transform_indices = @transform_0, window_bounds = array<i64: 64, 4>}, {transform_indices = @transform_1, window_bounds = array<i64: 1, 4, 512>}, {pipeline_mode = #tpu.pipeline_mode<synchronous>, transform_indices = @transform_2, window_bounds = array<i64: 64, 1>}, {transform_indices = @transform_3, window_bounds = array<i64: 1, 64, 512>}]} {
    %c0 = arith.constant 0 : index
    %c0_0 = arith.constant 0 : index
    %0 = vector.load %arg2[%c0, %c0_0] : memref<64x4xf32, #tpu.memory_space<vmem>>, vector<64x4xf32>
    %c0_1 = arith.constant 0 : index
    %c0_2 = arith.constant 0 : index
    %c0_3 = arith.constant 0 : index
    %1 = vector.load %arg3[%c0_1, %c0_2, %c0_3] : memref<1x4x512xf32, #tpu.memory_space<vmem>>, vector<1x4x512xf32>
    %2 = vector.shape_cast %1 : vector<1x4x512xf32> to vector<4x512xf32>
    %cst = arith.constant dense<0.000000e+00> : vector<64x512xf32>
    %3 = tpu.matmul %0, %2, %cst {dimension_numbers = #tpu.dot_dimension_numbers<[1], [0], [0], [1], [0, 0, 1, 1], [], []>} : vector<64x4xf32>, vector<4x512xf32>, vector<64x512xf32> -> vector<64x512xf32>
    %c0_4 = arith.constant 0 : index
    %c0_5 = arith.constant 0 : index
    %4 = vector.load %arg4[%c0_4, %c0_5] : memref<64x1xf32, #tpu.memory_space<vmem>>, vector<64x1xf32>
    %5 = vector.broadcast %4 : vector<64x1xf32> to vector<64x512xf32>
    %6 = arith.addf %3, %5 : vector<64x512xf32>
    %cst_6 = arith.constant 0.000000e+00 : f32
    %7 = vector.broadcast %cst_6 : f32 to vector<64x512xf32>
    %8 = arith.maximumf %6, %7 : vector<64x512xf32>
    %c0_7 = arith.constant 0 : index
    %c0_8 = arith.constant 0 : index
    %c0_9 = arith.constant 0 : index
    %9 = vector.load %arg5[%c0_7, %c0_8, %c0_9] : memref<1x64x512xf32, #tpu.memory_space<vmem>>, vector<1x64x512xf32>
    %10 = vector.shape_cast %9 : vector<1x64x512xf32> to vector<64x512xf32>
    %11 = vector.shape_cast %8 : vector<64x512xf32> to vector<1x64x512xf32>
    tpu.vector_store %arg5[%c0_7, %c0_8, %c0_9], %11 {strides = array<i32>} : memref<1x64x512xf32, #tpu.memory_space<vmem>>, vector<1x64x512xf32>,
    return
  }
  func.func @transform_0(%arg0: i32, %arg1: i32) -> (i32, i32) {
    %c0_i32 = arith.constant 0 : i32
    %c0_i32_0 = arith.constant 0 : i32
    %c0_i32_1 = arith.constant 0 : i32
    return %c0_i32, %c0_i32_0 : i32, i32
  }
  func.func @transform_1(%arg0: i32, %arg1: i32) -> (i32, i32, i32) {
    %c0_i32 = arith.constant 0 : i32
    %c0_i32_0 = arith.constant 0 : i32
    return %arg0, %c0_i32, %arg1 : i32, i32, i32
  }
  func.func @transform_2(%arg0: i32, %arg1: i32) -> (i32, i32) {
    %c0_i32 = arith.constant 0 : i32
    %c0_i32_0 = arith.constant 0 : i32
    %c0_i32_1 = arith.constant 0 : i32
    return %c0_i32, %c0_i32_0 : i32, i32
  }
  func.func @transform_3(%arg0: i32, %arg1: i32) -> (i32, i32, i32) {
    %c0_i32 = arith.constant 0 : i32
    %c0_i32_0 = arith.constant 0 : i32
    return %arg0, %c0_i32, %arg1 : i32, i32, i32
  }
}

</mosaic_0001>

<llo_original>
// kernel: tpu_custom_call.1
$region0: #{tpu_custom_call.1}
  #allocation0 [shape = 'u32[]', space=smem, size = 0x4, offset = 0x4, fixed_abs, tag = 'smem constant byte address 0x4 - core index']
  #allocation1 [shape = 'u32[144,128]{1,0:T(1,128)}', space=vmem, size = 0x12000, scoped, tag = 'internal scratch']
  %s0 = inlined_call_operand.vmem [shape: f32[64,4], index: 0, kind: input, shape index: {}]
  %s1 = inlined_call_operand.vmem [shape: f32[2,4,512], index: 1, kind: input, shape index: {}]
  %s2 = inlined_call_operand.vmem [shape: f32[64,1], index: 2, kind: input, shape index: {}]
  %s3 = inlined_call_operand.hbm [shape: f32[2,64,512], index: 3, kind: output, shape index: {}]
  %s4 = sld [smem:[#allocation0]]
  $region45: #{tpu_custom_call.1} parent=0
    _
  %s6 = ssub.s32 1, %s4
  %s7 = scalar_select 0, %s6, %s4
  $region1: #{tpu_custom_call.1} parent=0
    #allocation2 [shape = 'u8[262144]{0}', space=vmem, size = 0x40000, scoped, tag = 'output window, operand 0']
    #allocation3 [shape = 's32[2]{0}', space=sflag, size = 0x8, scoped, tag = 'scoped memory for tpu_custom_call.1']
    %8 = vsyncpa [#allocation3], 0
    %s9 = scalar_lea.sflag [#allocation3], 1
    %10 = vsyncpa %s9, 0
    loop: start=0, step=1, limit=4
    $region2: #{tpu_custom_call.1} parent=1 // loop_pre_header
      _
    $region3: #{tpu_custom_call.1} parent=1 // loop_header
      %s12 = sphi 0, %s16
      %p13 = scmp.ge.s32.totalorder %s12, 4
      %s19 = sphi 0, %s31
      %s20 = sphi 0, %s27
      %s21 = sphi 0, %s19
      %s22 = sphi 0, %s20
      %s23 = sphi 0, %s21
      %s24 = sphi 0, %s22
      %s32 = sphi 0, %s32
      %s34 = sphi 0, %s32
      %s35 = sphi 0, %s34
      %s49 = sphi 0, %s35
      %s57 = sphi 0, %s59
      %s60 = sphi 0, %s57
      %s61 = sphi 0, %s60
      %s77 = sphi 0, %s61
      %s81 = sphi 0, %s81
      %s83 = sphi 0, %s81
      %s84 = sphi 0, %s83
      %s98 = sphi 0, %s84
      %s106 = sphi 0, %s108
      %s109 = sphi 0, %s106
      %s110 = sphi 0, %s109
      %s126 = sphi 0, %s110
    $region4: #{tpu_custom_call.1} parent=1 // loop_header_branch
      %15 = sbr.rel (%p13) target = $region8
    $region5: #{tpu_custom_call.1} parent=1 // loop_body
      %s17 = ssub.s32 %s12, 1
      %s18 = ssub.s32 %s12, 2
      %s25 = sadd.s32 1, %s20
      %p26 = scmp.ge.s32.totalorder %s25, 1
      %s27 = scalar_select %p26, 0, %s25
      %s28 = sadd.s32 1, %s19
      %s29 = scalar_select %p26, %s28, %s19
      %p30 = scmp.ge.s32.totalorder %s29, 2
      %s31 = scalar_select %p30, 0, %s29
      %s33 = sadd.s32 %s32, 1
      %p36 = scmp.eq.s32.totalorder %s12, 1
      %p37 = scmp.ne.s32.totalorder %s32, %s34
      %p38 = scmp.eq.s32.totalorder %s12, 0
      %p39 = por %p37, %p38
      %p40 = scmp.ne.s32.totalorder %s32, %s34
      %p41 = scmp.eq.s32.totalorder %s17, 1
      %p42 = por %p40, %p41
      %p43 = scmp.ne.s32.totalorder %s34, %s35
      %p44 = scmp.eq.s32.totalorder %s17, 0
      %p45 = por %p43, %p44
      %p46 = scmp.ne.s32.totalorder %s34, %s35
      %p47 = scmp.eq.s32.totalorder %s18, 1
      %p48 = por %p46, %p47
      %p50 = scmp.ne.s32.totalorder %s35, %s49
      %p51 = scmp.eq.s32.totalorder %s18, 0
      %p52 = por %p50, %p51
      %s53 = ssub.s32 %s19, %s31
      %s54 = ssub.s32 %s20, %s27
      %s55 = sor.u32 %s53, %s54
      %p56 = scmp.eq.s32.totalorder %s55, 0
      %s58 = sadd.s32 %s57, 1
      %s59 = scalar_select %p56, %s57, %s58
      %p62 = pneg %p56
      %p63 = scmp.eq.s32.totalorder %s12, 1
      %p64 = por %p62, %p63
      %p65 = scmp.ne.s32.totalorder %s57, %s60
      %p66 = scmp.eq.s32.totalorder %s12, 0
      %p67 = por %p65, %p66
      %p68 = scmp.ne.s32.totalorder %s57, %s60
      %p69 = scmp.eq.s32.totalorder %s17, 1
      %p70 = por %p68, %p69
      %p71 = scmp.ne.s32.totalorder %s60, %s61
      %p72 = scmp.eq.s32.totalorder %s17, 0
      %p73 = por %p71, %p72
      %p74 = scmp.ne.s32.totalorder %s60, %s61
      %p75 = scmp.eq.s32.totalorder %s18, 1
      %p76 = por %p74, %p75
      %p78 = scmp.ne.s32.totalorder %s61, %s77
      %p79 = scmp.eq.s32.totalorder %s18, 0
      %p80 = por %p78, %p79
      %s82 = sadd.s32 %s81, 1
      %p85 = scmp.eq.s32.totalorder %s12, 1
      %p86 = scmp.ne.s32.totalorder %s81, %s83
      %p87 = scmp.eq.s32.totalorder %s12, 0
      %p88 = por %p86, %p87
      %p89 = scmp.ne.s32.totalorder %s81, %s83
      %p90 = scmp.eq.s32.totalorder %s17, 1
      %p91 = por %p89, %p90
      %p92 = scmp.ne.s32.totalorder %s83, %s84
      %p93 = scmp.eq.s32.totalorder %s17, 0
      %p94 = por %p92, %p93
      %p95 = scmp.ne.s32.totalorder %s83, %s84
      %p96 = scmp.eq.s32.totalorder %s18, 1
      %p97 = por %p95, %p96
      %p99 = scmp.ne.s32.totalorder %s84, %s98
      %p100 = scmp.eq.s32.totalorder %s18, 0
      %p101 = por %p99, %p100
      %s102 = ssub.s32 %s19, %s31
      %s103 = ssub.s32 %s20, %s27
      %s104 = sor.u32 %s102, %s103
      %p105 = scmp.eq.s32.totalorder %s104, 0
      %s107 = sadd.s32 %s106, 1
      %s108 = scalar_select %p105, %s106, %s107
      %p111 = pneg %p105
      %p112 = scmp.eq.s32.totalorder %s12, 1
      %p113 = por %p111, %p112
      %p114 = scmp.ne.s32.totalorder %s106, %s109
      %p115 = scmp.eq.s32.totalorder %s12, 0
      %p116 = por %p114, %p115
      %p117 = scmp.ne.s32.totalorder %s106, %s109
      %p118 = scmp.eq.s32.totalorder %s17, 1
      %p119 = por %p117, %p118
      %p120 = scmp.ne.s32.totalorder %s109, %s110
      %p121 = scmp.eq.s32.totalorder %s17, 0
      %p122 = por %p120, %p121
      %p123 = scmp.ne.s32.totalorder %s109, %s110
      %p124 = scmp.eq.s32.totalorder %s18, 1
      %p125 = por %p123, %p124
      %p127 = scmp.ne.s32.totalorder %s110, %s126
      %p128 = scmp.eq.s32.totalorder %s18, 0
      %p129 = por %p127, %p128
      %p130 = scmp.le.s32.totalorder 1, %s12
      %p131 = scmp.lt.s32.totalorder %s12, 3
      %p132 = pnand %p130, %p131
      %p133 = pneg %p132
      // Predicated region
      $region9: #{tpu_custom_call.1} parent=5 // pred_check
        _
      $region10: #{tpu_custom_call.1} parent=5 // pred_check_branch
        %135 = sbr.rel (%p132) target = $region12
      $region11: #{tpu_custom_call.1} parent=5 // pred_region
        %s136 = ssub.s32 %s12, 1
        // Predicated region
        $region13: #{tpu_custom_call.1} parent=11 // pred_check
          %p137 = pneg %p45
        $region14: #{tpu_custom_call.1} parent=11 // pred_check_branch
          %139 = sbr.rel (%p137) target = $region16
        $region15: #{tpu_custom_call.1} parent=11 // pred_region
          _
        $region16: #{tpu_custom_call.1} parent=11 // pred_fallthru
          _
        // Predicated region
        $region17: #{tpu_custom_call.1} parent=11 // pred_check
          %p140 = pneg %p94
        $region18: #{tpu_custom_call.1} parent=11 // pred_check_branch
          %142 = sbr.rel (%p140) target = $region20
        $region19: #{tpu_custom_call.1} parent=11 // pred_region
          _
        $region20: #{tpu_custom_call.1} parent=11 // pred_fallthru
          _
      $region12: #{tpu_custom_call.1} parent=5 // pred_fallthru
        _
      %p143 = scmp.lt.s32.totalorder %s12, 2
      // Predicated region
      $region21: #{tpu_custom_call.1} parent=5 // pred_check
        %p144 = pneg %p143
      $region22: #{tpu_custom_call.1} parent=5 // pred_check_branch
        %146 = sbr.rel (%p144) target = $region24
      $region23: #{tpu_custom_call.1} parent=5 // pred_region
        // Predicated region
        $region25: #{tpu_custom_call.1} parent=23 // pred_check
          %p147 = pneg %p67
        $region26: #{tpu_custom_call.1} parent=23 // pred_check_branch
          %149 = sbr.rel (%p147) target = $region28
        $region27: #{tpu_custom_call.1} parent=23 // pred_region
          %s150 = smul.u32 4, %s20
          %p151 = scmp.lt.s32.totalorder %s19, 1
          %s152 = scalar_select %p151, %s19, 1
          %p153 = scmp.lt.s32.totalorder %s150, 3
          %s154 = scalar_select %p153, %s150, 3
          %s155 = smul.addr %s152, 4
          %s156 = sadd.s32 %s154, %s155
          %s157 = smul.addr %s156, 4
          %s158 = scalar_lea.vmem %s1, %s157
          %s159 = smul.u32 4, %s20
        $region28: #{tpu_custom_call.1} parent=23 // pred_fallthru
          _
      $region24: #{tpu_custom_call.1} parent=5 // pred_fallthru
        _
      %p160 = scmp.le.s32.totalorder 1, %s12
      %p161 = scmp.lt.s32.totalorder %s12, 3
      %p162 = pnand %p160, %p161
      %p163 = pneg %p162
      // Predicated region
      $region29: #{tpu_custom_call.1} parent=5 // pred_check
        _
      $region30: #{tpu_custom_call.1} parent=5 // pred_check_branch
        %165 = sbr.rel (%p162) target = $region32
      $region31: #{tpu_custom_call.1} parent=5 // pred_region
        %s166 = ssub.s32 %s12, 1
        %p167 = pneg %p45
        %p168 = pneg %p42
        %s169 = smul.u32 4, %s22
        %p170 = scmp.lt.s32.totalorder %s21, 1
        %s171 = scalar_select %p170, %s21, 1
        %p172 = scmp.lt.s32.totalorder %s169, 3
        %s173 = scalar_select %p172, %s169, 3
        %s174 = smul.addr %s171, 4
        %s175 = sadd.s32 %s173, %s174
        %s176 = smul.addr %s175, 4
        %s177 = scalar_lea.vmem %s1, %s176
        %p178 = pneg %p73
        %p179 = pneg %p70
        %p180 = pneg %p94
        %p181 = pneg %p91
        %p182 = pneg %p122
        %p183 = pneg %p119
        %s184 = sand.u32 %s109, 1
        %s185 = scalar_lea.sflag [#allocation3], %s184
        %s186 = sand.u32 %s109, 1
        %s187 = smul.addr %s186, 256
        %s188 = scalar_lea.vmem [#allocation2], %s187
        %s189 = smul.u32 4, %s22
        %p190 = scmp.lt.s32.totalorder %s21, 1
        %s191 = scalar_select %p190, %s21, 1
        %p192 = scmp.lt.s32.totalorder %s189, 3
        %s193 = scalar_select %p192, %s189, 3
        %s194 = smul.addr %s191, 4
        %s195 = sadd.s32 %s193, %s194
        %s196 = smul.addr %s195, 4
        %s197 = scalar_lea.vmem %s1, %s196
        %s198 = smul.u32 4, %s22
        %s199 = smul.u32 4, %s22
        %v200 = vld [vmem:[%s0] sm:$0xff]
        %v201 = vld [vmem:[%s0 + $0x8] sm:$0xff]
        %v202 = vld [vmem:[%s0 + $0x10] sm:$0xff]
        %v203 = vld [vmem:[%s0 + $0x18] sm:$0xff]
        %v204 = vld [vmem:[%s0 + $0x20] sm:$0xff]
        %v205 = vld [vmem:[%s0 + $0x28] sm:$0xff]
        %v206 = vld [vmem:[%s0 + $0x30] sm:$0xff]
        %v207 = vld [vmem:[%s0 + $0x38] sm:$0xff]
        %v208 = vld [vmem:[%s197] sm:$0xff]
        %v209 = vld [vmem:[%s197 + $0x8] sm:$0xff]
        %v210 = vld [vmem:[%s2] sm:$0xff]
        %v211 = vld [vmem:[%s2 + $0x8] sm:$0xff]
        %v212 = vld [vmem:[%s2 + $0x10] sm:$0xff]
        %v213 = vld [vmem:[%s2 + $0x18] sm:$0xff]
        %v214 = vld [vmem:[%s2 + $0x20] sm:$0xff]
        %v215 = vld [vmem:[%s2 + $0x28] sm:$0xff]
        %v216 = vld [vmem:[%s2 + $0x30] sm:$0xff]
        %v217 = vld [vmem:[%s2 + $0x38] sm:$0xff]
        %219 = vset.pattern.permute.xlu0 0
        %220 = vperm.xlu0 %219, %v210
        %v221 = vpop.permute.xlu0 %220
        %224 = vset.pattern.permute.xlu0 0
        %225 = vperm.xlu0 %224, %v211
        %v226 = vpop.permute.xlu0 %225
        %229 = vset.pattern.permute.xlu0 0
        %230 = vperm.xlu0 %229, %v212
        %v231 = vpop.permute.xlu0 %230
        %234 = vset.pattern.permute.xlu0 0
        %235 = vperm.xlu0 %234, %v213
        %v236 = vpop.permute.xlu0 %235
        %239 = vset.pattern.permute.xlu0 0
        %240 = vperm.xlu0 %239, %v214
        %v241 = vpop.permute.xlu0 %240
        %244 = vset.pattern.permute.xlu0 0
        %245 = vperm.xlu0 %244, %v215
        %v246 = vpop.permute.xlu0 %245
        %249 = vset.pattern.permute.xlu0 0
        %250 = vperm.xlu0 %249, %v216
        %v251 = vpop.permute.xlu0 %250
        %254 = vset.pattern.permute.xlu0 0
        %255 = vperm.xlu0 %254, %v217
        %v256 = vpop.permute.xlu0 %255
        %v260 = vcombine.high %v208, %v208
        %v261 = vcombine.high %v209, %v209
        %vm262 = vcmask 31744
        %v264 = vsel %vm262, %v200, 0
        %v267 = vsel %vm262, %v201, 0
        %v270 = vsel %vm262, %v202, 0
        %v273 = vsel %vm262, %v203, 0
        %v276 = vsel %vm262, %v204, 0
        %v279 = vsel %vm262, %v205, 0
        %v282 = vsel %vm262, %v206, 0
        %v285 = vsel %vm262, %v207, 0
        %vm287 = vcmask 1043456
        %v288 = vsel %vm287, %v208, 0
        %v290 = vsel %vm287, %v260, 0
        %v292 = vsel %vm287, %v209, 0
        %v294 = vsel %vm287, %v261, 0
        %296 = vmatprep.subr.mxu0 0.0
        %297 = vmatpush1.msra.mxu0 0.0
        %298 = vmatprep.subr.mxu0 0.0
        %299 = vmatpush1.msra.mxu0 0.0
        %300 = vmatprep.subr.mxu0 0.0
        %301 = vmatpush1.msra.mxu0 0.0
        %302 = vmatprep.subr.mxu0 0.0
        %303 = vmatpush1.msra.mxu0 0.0
        %304 = vmatprep.subr.mxu0 0.0
        %305 = vmatpush1.msra.mxu0 0.0
        %306 = vmatprep.subr.mxu0 0.0
        %307 = vmatpush1.msra.mxu0 0.0
        %308 = vmatprep.subr.mxu0 0.0
        %309 = vmatpush1.msra.mxu0 0.0
        %310 = vmatprep.subr.mxu0 0.0
        %311 = vmatpush1.msra.mxu0 0.0
        %312 = vmatprep.subr.mxu0 0.0
        %313 = vmatpush1.msra.mxu0 0.0
        %314 = vmatprep.subr.mxu0 0.0
        %315 = vmatpush1.msra.mxu0 0.0
        %316 = vmatprep.subr.mxu0 0.0
        %317 = vmatpush1.msra.mxu0 0.0
        %318 = vmatprep.subr.mxu0 0.0
        %319 = vmatpush1.msra.mxu0 0.0
        %320 = vmatprep.subr.mxu0 0.0
        %321 = vmatpush1.msra.mxu0 0.0
        %322 = vmatprep.subr.mxu0 0.0
        %323 = vmatpush1.msra.mxu0 0.0
        %324 = vmatprep.subr.mxu0 0.0
        %325 = vmatpush1.msra.mxu0 0.0
        %326 = vmatprep.subr.mxu0 %v290
        %327 = vmatpush1.msra.mxu0 %v288
        %328 = vmatprep.subr.mxu0 0.0
        %329 = vmatpush2.msra.mxu0 0.0
        %330 = vmatprep.subr.mxu0 0.0
        %331 = vmatpush2.msra.mxu0 0.0
        %332 = vmatprep.subr.mxu0 0.0
        %333 = vmatpush2.msra.mxu0 0.0
        %334 = vmatprep.subr.mxu0 0.0
        %335 = vmatpush2.msra.mxu0 0.0
        %336 = vmatprep.subr.mxu0 0.0
        %337 = vmatpush2.msra.mxu0 0.0
        %338 = vmatprep.subr.mxu0 0.0
        %339 = vmatpush2.msra.mxu0 0.0
        %340 = vmatprep.subr.mxu0 0.0
        %341 = vmatpush2.msra.mxu0 0.0
        %342 = vmatprep.subr.mxu0 0.0
        %343 = vmatpush2.msra.mxu0 0.0
        %344 = vmatprep.subr.mxu0 0.0
        %345 = vmatpush2.msra.mxu0 0.0
        %346 = vmatprep.subr.mxu0 0.0
        %347 = vmatpush2.msra.mxu0 0.0
        %348 = vmatprep.subr.mxu0 0.0
        %349 = vmatpush2.msra.mxu0 0.0
        %350 = vmatprep.subr.mxu0 0.0
        %351 = vmatpush2.msra.mxu0 0.0
        %352 = vmatprep.subr.mxu0 0.0
        %353 = vmatpush2.msra.mxu0 0.0
        %354 = vmatprep.subr.mxu0 0.0
        %355 = vmatpush2.msra.mxu0 0.0
        %356 = vmatprep.subr.mxu0 0.0
        %357 = vmatpush2.msra.mxu0 0.0
        %358 = vmatprep.subr.mxu0 0.0
        %359 = vmatpush2.msra.mxu0 0.0
        %360 = vmatprep.mubr.f32.mxu0 0.0
        %361 = vmatmul.mubr.f32.gmra.mxu0 %v264
        %v362 = vpop.f32.mrf.mxu0
        %v363 = vadd.f32 %v221, %v362
        %v364 = vpop.f32.mrf.mxu0
        %v365 = vadd.f32 %v221, %v364
        %366 = vmatprep.mubr.f32.mxu0 0.0
        %367 = vmatmul.mubr.f32.gmra.mxu0 %v267
        %v368 = vpop.f32.mrf.mxu0
        %v369 = vadd.f32 %v226, %v368
        %v370 = vpop.f32.mrf.mxu0
        %v371 = vadd.f32 %v226, %v370
        %372 = vmatprep.mubr.f32.mxu0 0.0
        %373 = vmatmul.mubr.f32.gmra.mxu0 %v270
        %v374 = vpop.f32.mrf.mxu0
        %v375 = vadd.f32 %v231, %v374
        %v376 = vpop.f32.mrf.mxu0
        %v377 = vadd.f32 %v231, %v376
        %378 = vmatprep.mubr.f32.mxu0 0.0
        %379 = vmatmul.mubr.f32.gmra.mxu0 %v273
        %v380 = vpop.f32.mrf.mxu0
        %v381 = vadd.f32 %v236, %v380
        %v382 = vpop.f32.mrf.mxu0
        %v383 = vadd.f32 %v236, %v382
        %384 = vmatprep.mubr.f32.mxu0 0.0
        %385 = vmatmul.mubr.f32.gmra.mxu0 %v276
        %v386 = vpop.f32.mrf.mxu0
        %v387 = vadd.f32 %v241, %v386
        %v388 = vpop.f32.mrf.mxu0
        %v389 = vadd.f32 %v241, %v388
        %390 = vmatprep.mubr.f32.mxu0 0.0
        %391 = vmatmul.mubr.f32.gmra.mxu0 %v279
        %v392 = vpop.f32.mrf.mxu0
        %v393 = vadd.f32 %v246, %v392
        %v394 = vpop.f32.mrf.mxu0
        %v395 = vadd.f32 %v246, %v394
        %396 = vmatprep.mubr.f32.mxu0 0.0
        %397 = vmatmul.mubr.f32.gmra.mxu0 %v282
        %v398 = vpop.f32.mrf.mxu0
        %v399 = vadd.f32 %v251, %v398
        %v400 = vpop.f32.mrf.mxu0
        %v401 = vadd.f32 %v251, %v400
        %402 = vmatprep.mubr.f32.mxu0 0.0
        %403 = vmatmul.mubr.f32.gmra.mxu0 %v285
        %v404 = vpop.f32.mrf.mxu0
        %v405 = vadd.f32 %v256, %v404
        %v406 = vpop.f32.mrf.mxu0
        %v407 = vadd.f32 %v256, %v406
        %408 = vdwg.mxu0
        %409 = vmatprep.subr.mxu0 0.0
        %410 = vmatpush1.msra.mxu0 0.0
        %411 = vmatprep.subr.mxu0 0.0
        %412 = vmatpush1.msra.mxu0 0.0
        %413 = vmatprep.subr.mxu0 0.0
        %414 = vmatpush1.msra.mxu0 0.0
        %415 = vmatprep.subr.mxu0 0.0
        %416 = vmatpush1.msra.mxu0 0.0
        %417 = vmatprep.subr.mxu0 0.0
        %418 = vmatpush1.msra.mxu0 0.0
        %419 = vmatprep.subr.mxu0 0.0
        %420 = vmatpush1.msra.mxu0 0.0
        %421 = vmatprep.subr.mxu0 0.0
        %422 = vmatpush1.msra.mxu0 0.0
        %423 = vmatprep.subr.mxu0 0.0
        %424 = vmatpush1.msra.mxu0 0.0
        %425 = vmatprep.subr.mxu0 0.0
        %426 = vmatpush1.msra.mxu0 0.0
        %427 = vmatprep.subr.mxu0 0.0
        %428 = vmatpush1.msra.mxu0 0.0
        %429 = vmatprep.subr.mxu0 0.0
        %430 = vmatpush1.msra.mxu0 0.0
        %431 = vmatprep.subr.mxu0 0.0
        %432 = vmatpush1.msra.mxu0 0.0
        %433 = vmatprep.subr.mxu0 0.0
        %434 = vmatpush1.msra.mxu0 0.0
        %435 = vmatprep.subr.mxu0 0.0
        %436 = vmatpush1.msra.mxu0 0.0
        %437 = vmatprep.subr.mxu0 0.0
        %438 = vmatpush1.msra.mxu0 0.0
        %439 = vmatprep.subr.mxu0 %v294
        %440 = vmatpush1.msra.mxu0 %v292
        %441 = vmatprep.subr.mxu0 0.0
        %442 = vmatpush2.msra.mxu0 0.0
        %443 = vmatprep.subr.mxu0 0.0
        %444 = vmatpush2.msra.mxu0 0.0
        %445 = vmatprep.subr.mxu0 0.0
        %446 = vmatpush2.msra.mxu0 0.0
        %447 = vmatprep.subr.mxu0 0.0
        %448 = vmatpush2.msra.mxu0 0.0
        %449 = vmatprep.subr.mxu0 0.0
        %450 = vmatpush2.msra.mxu0 0.0
        %451 = vmatprep.subr.mxu0 0.0
        %452 = vmatpush2.msra.mxu0 0.0
        %453 = vmatprep.subr.mxu0 0.0
        %454 = vmatpush2.msra.mxu0 0.0
        %455 = vmatprep.subr.mxu0 0.0
        %456 = vmatpush2.msra.mxu0 0.0
        %457 = vmatprep.subr.mxu0 0.0
        %458 = vmatpush2.msra.mxu0 0.0
        %459 = vmatprep.subr.mxu0 0.0
        %460 = vmatpush2.msra.mxu0 0.0
        %461 = vmatprep.subr.mxu0 0.0
        %462 = vmatpush2.msra.mxu0 0.0
        %463 = vmatprep.subr.mxu0 0.0
        %464 = vmatpush2.msra.mxu0 0.0
        %465 = vmatprep.subr.mxu0 0.0
        %466 = vmatpush2.msra.mxu0 0.0
        %467 = vmatprep.subr.mxu0 0.0
        %468 = vmatpush2.msra.mxu0 0.0
        %469 = vmatprep.subr.mxu0 0.0
        %470 = vmatpush2.msra.mxu0 0.0
        %471 = vmatprep.subr.mxu0 0.0
        %472 = vmatpush2.msra.mxu0 0.0
        %473 = vmatprep.mubr.f32.mxu0 0.0
        %474 = vmatmul.mubr.f32.gmra.mxu0 %v264
        %v475 = vpop.f32.mrf.mxu0
        %v476 = vadd.f32 %v221, %v475
        %v477 = vpop.f32.mrf.mxu0
        %v478 = vadd.f32 %v221, %v477
        %479 = vmatprep.mubr.f32.mxu0 0.0
        %480 = vmatmul.mubr.f32.gmra.mxu0 %v267
        %v481 = vpop.f32.mrf.mxu0
        %v482 = vadd.f32 %v226, %v481
        %v483 = vpop.f32.mrf.mxu0
        %v484 = vadd.f32 %v226, %v483
        %485 = vmatprep.mubr.f32.mxu0 0.0
        %486 = vmatmul.mubr.f32.gmra.mxu0 %v270
        %v487 = vpop.f32.mrf.mxu0
        %v488 = vadd.f32 %v231, %v487
        %v489 = vpop.f32.mrf.mxu0
        %v490 = vadd.f32 %v231, %v489
        %491 = vmatprep.mubr.f32.mxu0 0.0
        %492 = vmatmul.mubr.f32.gmra.mxu0 %v273
        %v493 = vpop.f32.mrf.mxu0
        %v494 = vadd.f32 %v236, %v493
        %v495 = vpop.f32.mrf.mxu0
        %v496 = vadd.f32 %v236, %v495
        %497 = vmatprep.mubr.f32.mxu0 0.0
        %498 = vmatmul.mubr.f32.gmra.mxu0 %v276
        %v499 = vpop.f32.mrf.mxu0
        %v500 = vadd.f32 %v241, %v499
        %v501 = vpop.f32.mrf.mxu0
        %v502 = vadd.f32 %v241, %v501
        %503 = vmatprep.mubr.f32.mxu0 0.0
        %504 = vmatmul.mubr.f32.gmra.mxu0 %v279
        %v505 = vpop.f32.mrf.mxu0
        %v506 = vadd.f32 %v246, %v505
        %v507 = vpop.f32.mrf.mxu0
        %v508 = vadd.f32 %v246, %v507
        %509 = vmatprep.mubr.f32.mxu0 0.0
        %510 = vmatmul.mubr.f32.gmra.mxu0 %v282
        %v511 = vpop.f32.mrf.mxu0
        %v512 = vadd.f32 %v251, %v511
        %v513 = vpop.f32.mrf.mxu0
        %v514 = vadd.f32 %v251, %v513
        %515 = vmatprep.mubr.f32.mxu0 0.0
        %516 = vmatmul.mubr.f32.gmra.mxu0 %v285
        %v517 = vpop.f32.mrf.mxu0
        %v518 = vadd.f32 %v256, %v517
        %v519 = vpop.f32.mrf.mxu0
        %v520 = vadd.f32 %v256, %v519
        %521 = vdwg.mxu0
        %v522 = vmax.f32 %v363, 0.0
        %v523 = vmax.f32 %v365, 0.0
        %v524 = vmax.f32 %v476, 0.0
        %v525 = vmax.f32 %v478, 0.0
        %v526 = vmax.f32 %v369, 0.0
        %v527 = vmax.f32 %v371, 0.0
        %v528 = vmax.f32 %v482, 0.0
        %v529 = vmax.f32 %v484, 0.0
        %v530 = vmax.f32 %v375, 0.0
        %v531 = vmax.f32 %v377, 0.0
        %v532 = vmax.f32 %v488, 0.0
        %v533 = vmax.f32 %v490, 0.0
        %v534 = vmax.f32 %v381, 0.0
        %v535 = vmax.f32 %v383, 0.0
        %v536 = vmax.f32 %v494, 0.0
        %v537 = vmax.f32 %v496, 0.0
        %v538 = vmax.f32 %v387, 0.0
        %v539 = vmax.f32 %v389, 0.0
        %v540 = vmax.f32 %v500, 0.0
        %v541 = vmax.f32 %v502, 0.0
        %v542 = vmax.f32 %v393, 0.0
        %v543 = vmax.f32 %v395, 0.0
        %v544 = vmax.f32 %v506, 0.0
        %v545 = vmax.f32 %v508, 0.0
        %v546 = vmax.f32 %v399, 0.0
        %v547 = vmax.f32 %v401, 0.0
        %v548 = vmax.f32 %v512, 0.0
        %v549 = vmax.f32 %v514, 0.0
        %v550 = vmax.f32 %v405, 0.0
        %v551 = vmax.f32 %v407, 0.0
        %v552 = vmax.f32 %v518, 0.0
        %v553 = vmax.f32 %v520, 0.0
        %554 = vst [vmem:[%s188] sm:$0xff] %v522
        %555 = vst [vmem:[%s188 + $0x8] sm:$0xff] %v523
        %556 = vst [vmem:[%s188 + $0x10] sm:$0xff] %v524
        %557 = vst [vmem:[%s188 + $0x18] sm:$0xff] %v525
        %558 = vst [vmem:[%s188 + $0x20] sm:$0xff] %v526
        %559 = vst [vmem:[%s188 + $0x28] sm:$0xff] %v527
        %560 = vst [vmem:[%s188 + $0x30] sm:$0xff] %v528
        %561 = vst [vmem:[%s188 + $0x38] sm:$0xff] %v529
        %562 = vst [vmem:[%s188 + $0x40] sm:$0xff] %v530
        %563 = vst [vmem:[%s188 + $0x48] sm:$0xff] %v531
        %564 = vst [vmem:[%s188 + $0x50] sm:$0xff] %v532
        %565 = vst [vmem:[%s188 + $0x58] sm:$0xff] %v533
        %566 = vst [vmem:[%s188 + $0x60] sm:$0xff] %v534
        %567 = vst [vmem:[%s188 + $0x68] sm:$0xff] %v535
        %568 = vst [vmem:[%s188 + $0x70] sm:$0xff] %v536
        %569 = vst [vmem:[%s188 + $0x78] sm:$0xff] %v537
        %570 = vst [vmem:[%s188 + $0x80] sm:$0xff] %v538
        %571 = vst [vmem:[%s188 + $0x88] sm:$0xff] %v539
        %572 = vst [vmem:[%s188 + $0x90] sm:$0xff] %v540
        %573 = vst [vmem:[%s188 + $0x98] sm:$0xff] %v541
        %574 = vst [vmem:[%s188 + $0xa0] sm:$0xff] %v542
        %575 = vst [vmem:[%s188 + $0xa8] sm:$0xff] %v543
        %576 = vst [vmem:[%s188 + $0xb0] sm:$0xff] %v544
        %577 = vst [vmem:[%s188 + $0xb8] sm:$0xff] %v545
        %578 = vst [vmem:[%s188 + $0xc0] sm:$0xff] %v546
        %579 = vst [vmem:[%s188 + $0xc8] sm:$0xff] %v547
        %580 = vst [vmem:[%s188 + $0xd0] sm:$0xff] %v548
        %581 = vst [vmem:[%s188 + $0xd8] sm:$0xff] %v549
        %582 = vst [vmem:[%s188 + $0xe0] sm:$0xff] %v550
        %583 = vst [vmem:[%s188 + $0xe8] sm:$0xff] %v551
        %584 = vst [vmem:[%s188 + $0xf0] sm:$0xff] %v552
        %585 = vst [vmem:[%s188 + $0xf8] sm:$0xff] %v553
        %s586 = sand.u32 %s109, 1
        %s587 = scalar_lea.sflag [#allocation3], %s586
        %s588 = sand.u32 %s109, 1
        %s589 = smul.addr %s588, 256
        %s590 = scalar_lea.vmem [#allocation2], %s589
        // Predicated region
        $region33: #{tpu_custom_call.1} parent=31 // pred_check
          %p591 = pneg %p119
        $region34: #{tpu_custom_call.1} parent=31 // pred_check_branch
          %593 = sbr.rel (%p591) target = $region36
        $region35: #{tpu_custom_call.1} parent=31 // pred_region
          %s594 = smul.u32 4, %s22
          %s596 = ssub.s32 4096, 4096
          %597 = vsyncadd %s587, %s596
          %s598 = smul.addr %s21, 32
          %s599 = sadd.s32 %s594, %s598
          %s600 = smul.addr %s599, 128
          %s601 = scalar_lea.hbm %s3, %s600
          %s602 = sshll.u32 %s590, 4
          %s603 = int_to_ptr.vmem [resolvable:$true] %s602
          %608 = dma.vmem_to_hbm [thread:$0]  %s603, 4096, %s601, %s587, 512, 512, 32
        $region36: #{tpu_custom_call.1} parent=31 // pred_fallthru
          _
      $region32: #{tpu_custom_call.1} parent=5 // pred_fallthru
        _
      %p609 = scmp.le.s32.totalorder 2, %s12
      // Predicated region
      $region37: #{tpu_custom_call.1} parent=5 // pred_check
        %p610 = pneg %p609
      $region38: #{tpu_custom_call.1} parent=5 // pred_check_branch
        %612 = sbr.rel (%p610) target = $region40
      $region39: #{tpu_custom_call.1} parent=5 // pred_region
        %s613 = ssub.s32 %s12, 2
        // Predicated region
        $region41: #{tpu_custom_call.1} parent=39 // pred_check
          %p614 = pneg %p125
        $region42: #{tpu_custom_call.1} parent=39 // pred_check_branch
          %616 = sbr.rel (%p614) target = $region44
        $region43: #{tpu_custom_call.1} parent=39 // pred_region
          %s617 = sand.u32 %s110, 1
          %s618 = scalar_lea.sflag [#allocation3], %s617
          %s619 = sand.u32 %s110, 1
          %s620 = smul.addr %s619, 256
          %s621 = scalar_lea.vmem [#allocation2], %s620
          %622 = dma.done %s618, 4096
        $region44: #{tpu_custom_call.1} parent=39 // pred_fallthru
          _
      $region40: #{tpu_custom_call.1} parent=5 // pred_fallthru
        _
    $region6: #{tpu_custom_call.1} parent=1 // loop_footer
      %s16 = sadd.s32 1, %s12
    $region7: #{tpu_custom_call.1} parent=1 // loop_footer_branch
      %11 = sbr.rel target = $region3
    $region8: #{tpu_custom_call.1} parent=1 // loop_exit
      _
    %623 = vsyncpa [#allocation3], 1
    %s624 = scalar_lea.sflag [#allocation3], 1
    %625 = vsyncpa %s624, 1

</llo_original>
